<compile_context>
chip_gen: v5e
topology: v5e:2x2
jax: 0.10.0
libtpu: 0.0.40
codegen_flags: <defaults>
</compile_context>

<pallas_src>
import math

import jax
import jax.numpy as jnp
from jax.experimental import pallas as pl
from jax.experimental.pallas import tpu as pltpu

NUM_HEADS = 4
LN_EPS = 1e-5


def _encoder_layer_kernel(x_ref, wqkv_ref, bqkv_ref, wo_ref, w1_ref, w2_ref,
                          p_ref, o_ref):
    """One TransformerEncoderLayer (post-norm, ReLU, eval-mode dropout) on (B, D)."""
    i = pl.program_id(0)
    B, D = x_ref.shape                                  # full feature batch
    qblk = o_ref.shape[0]                               # query rows handled this step
    H = NUM_HEADS

    row0 = pl.multiple_of(i * qblk, qblk)
    xq = x_ref[pl.ds(row0, qblk), :]                    # (qblk, D) f32, residual path
    xq_bf = xq.astype(jnp.bfloat16)
    xall_bf = x_ref[...].astype(jnp.bfloat16)           # (B, D) source of K/V

    wqkv = wqkv_ref[...]                                # (3H, D, hd) bf16, q-scale folded
    bqkv = bqkv_ref[...]                                # (3H, 1, hd) f32, q-scale folded
    p = p_ref[...]                                      # (8, D) f32 vector params

    bmm = (((2,), (1,)), ((0,), (0,)))                  # batched (., M, K) x (., K, N)

    # --- QKV projections directly in head-major (heads, rows, hd) layout: no
    #     per-head lane slicing / relayout.  Q only for this query block.
    q3 = jax.lax.dot_general(jnp.broadcast_to(xq_bf, (H, qblk, D)), wqkv[0:H],
                             bmm, preferred_element_type=jnp.float32) + bqkv[0:H]
    kv3 = jax.lax.dot_general(jnp.broadcast_to(xall_bf, (2 * H, B, D)),
                              wqkv[H:3 * H], bmm,
                              preferred_element_type=jnp.float32) + bqkv[H:3 * H]
    k3 = kv3[0:H]                                       # (H, B, hd) f32
    v3 = kv3[H:2 * H]                                   # (H, B, hd) f32

    # --- attention across the feature batch, all heads in one batched dot_general;
    #     a single max / exp / sum / reciprocal chain instead of one per head.
    s = jax.lax.dot_general(q3, k3, (((2,), (2,)), ((0,), (0,))),
                            preferred_element_type=jnp.float32)       # (H, qblk, B)
    s = s - jnp.max(s, axis=-1, keepdims=True)
    e = jnp.exp(s)
    prob = e * pl.reciprocal(jnp.sum(e, axis=-1, keepdims=True), approx=True)
    o3 = jax.lax.dot_general(prob, v3, bmm,
                             preferred_element_type=jnp.float32)      # (H, qblk, hd)

    # --- output projection: one batched dot_general against per-head Wo^T blocks;
    #     head accumulation is a cheap leading-axis sum (no concatenate/relayout).
    ao = jax.lax.dot_general(o3.astype(jnp.bfloat16), wo_ref[...], bmm,
                             preferred_element_type=jnp.float32)      # (H, qblk, D)
    attn = jnp.sum(ao, axis=0) + p[0:1, :]                            # + out_proj bias

    # --- residual + LayerNorm 1 (dropout1 is identity in eval mode).
    #     One pass: sum and sum-of-squares are independent reductions.
    inv_d = 1.0 / D
    y = xq + attn
    mu = jnp.sum(y, axis=-1, keepdims=True) * inv_d
    ms = jnp.sum(y * y, axis=-1, keepdims=True) * inv_d
    y = (y - mu) * jax.lax.rsqrt(ms - mu * mu + LN_EPS) * p[1:2, :] + p[2:3, :]

    # --- feed-forward: linear1 -> ReLU -> linear2 (dropouts are identity).
    ff = jnp.dot(y.astype(jnp.bfloat16), w1_ref[...],
                 preferred_element_type=jnp.float32) + p[3:4, :]
    ff = jnp.maximum(ff, 0.0)
    ff = jnp.dot(ff.astype(jnp.bfloat16), w2_ref[...],
                 preferred_element_type=jnp.float32) + p[4:5, :]

    # --- residual + LayerNorm 2 (one pass).
    z = y + ff
    mu2 = jnp.sum(z, axis=-1, keepdims=True) * inv_d
    ms2 = jnp.sum(z * z, axis=-1, keepdims=True) * inv_d
    z = (z - mu2) * jax.lax.rsqrt(ms2 - mu2 * mu2 + LN_EPS) * p[5:6, :] + p[6:7, :]

    o_ref[...] = z.astype(o_ref.dtype)


class TransformerDecorator:
    """JAX/Pallas port of ret_benchmark.modeling.batchformer.TransformerDecorator."""

    def __init__(self, add_bf=False, dim=32, eval_global=0, seed=0):
        assert dim % NUM_HEADS == 0
        self.add_bf = add_bf
        self.eval_global = eval_global
        self.dim = dim
        dff = dim                          # the module uses dim_feedforward = dim
        assert dff == dim, "parameter packing assumes dim_feedforward == dim"
        H = NUM_HEADS
        hd = dim // H
        scale = 1.0 / math.sqrt(hd)

        key = jax.random.PRNGKey(seed)
        k_in, k_out, k_w1, k_b1, k_w2, k_b2 = jax.random.split(key, 6)

        # nn.MultiheadAttention defaults: xavier_uniform_(in_proj_weight), zero
        # in_proj / out_proj biases; out_proj / linear1 / linear2 use nn.Linear init.
        a_in = math.sqrt(6.0 / (dim + 3 * dim))
        w_in = jax.random.uniform(k_in, (3 * dim, dim), jnp.float32, -a_in, a_in)
        self.wq, self.wk, self.wv = w_in[:dim], w_in[dim:2 * dim], w_in[2 * dim:]
        self.bq = jnp.zeros((dim,), jnp.float32)
        self.bk = jnp.zeros((dim,), jnp.float32)
        self.bv = jnp.zeros((dim,), jnp.float32)
        a_lin = 1.0 / math.sqrt(dim)
        self.wo = jax.random.uniform(k_out, (dim, dim), jnp.float32, -a_lin, a_lin)
        self.bo = jnp.zeros((dim,), jnp.float32)
        self.w1 = jax.random.uniform(k_w1, (dff, dim), jnp.float32, -a_lin, a_lin)
        self.b1 = jax.random.uniform(k_b1, (dff,), jnp.float32, -a_lin, a_lin)
        a_ff = 1.0 / math.sqrt(dff)
        self.w2 = jax.random.uniform(k_w2, (dim, dff), jnp.float32, -a_ff, a_ff)
        self.b2 = jax.random.uniform(k_b2, (dim,), jnp.float32, -a_ff, a_ff)
        self.g1 = jnp.ones((dim,), jnp.float32)
        self.be1 = jnp.zeros((dim,), jnp.float32)
        self.g2 = jnp.ones((dim,), jnp.float32)
        self.be2 = jnp.zeros((dim,), jnp.float32)

        # TODO(synk): Dropout(p=0.5) has no deterministic Pallas equivalent here;
        # implemented with eval-mode (identity) semantics.
        # TODO(synk): for dim >~ 1k the FF / QKV weights should be streamed with a
        # K/N-tiled grid instead of being fully VMEM-resident (v7x has 64 MiB VMEM).

        # --- MXU-ready packing ------------------------------------------------
        # QKV weights in head-major (3H, dim, hd) layout so the kernel's batched
        # matmul emits q/k/v already split per head; 1/sqrt(hd) query scale folded
        # into the Wq blocks and bq (mathematically identical to PyTorch).
        wqkv3 = jnp.transpose(w_in.reshape(3, H, hd, dim), (0, 1, 3, 2))
        wqkv3 = wqkv3.reshape(3 * H, dim, hd)
        wqkv3 = wqkv3.at[0:H].multiply(scale)
        self.wqkv3 = wqkv3.astype(jnp.bfloat16)
        bqkv3 = jnp.concatenate([self.bq, self.bk, self.bv]).reshape(3 * H, 1, hd)
        self.bqkv3 = bqkv3.at[0:H].multiply(scale).astype(jnp.float32)
        # Per-head rows of Wo^T: (H, hd, dim); accumulated via a leading-axis sum.
        self.wo3 = self.wo.T.reshape(H, hd, dim).astype(jnp.bfloat16)
        # Feed-forward weights pre-transposed to (in, out) for direct matmuls.
        self.w1t = self.w1.T.astype(jnp.bfloat16)        # (dim, dff)
        self.w2t = self.w2.T.astype(jnp.bfloat16)        # (dff, dim)
        # Biases / LayerNorm params as one sublane-aligned (8, dim) f32 slab:
        # [bo, g1, be1, b1, b2, g2, be2, pad].
        self.pvec = jnp.stack([self.bo, self.g1, self.be1, self.b1, self.b2,
                               self.g2, self.be2, jnp.zeros((dim,), jnp.float32)],
                              axis=0)

    # ------------------------------------------------------------------ kernel call
    def _encoder_layer(self, x):
        B, D = x.shape
        H = NUM_HEADS
        hd = D // H

        # Query-row grid: marked "parallel" so large batches are split across both
        # TensorCores on v7x and the (qblk, B) score matrix stays bounded; for the
        # small demo shapes it degenerates to a single grid step.
        qblk = 128 if (B % 128 == 0 and B >= 256) else B
        grid = (B // qblk,)

        def full2(shape):
            return pl.BlockSpec(shape, lambda i: (0, 0))

        def full3(shape):
            return pl.BlockSpec(shape, lambda i: (0, 0, 0))

        in_specs = [
            full2((B, D)),                  # feature (K/V need all rows every step)
            full3(self.wqkv3.shape),
            full3(self.bqkv3.shape),
            full3(self.wo3.shape),
            full2(self.w1t.shape),
            full2(self.w2t.shape),
            full2(self.pvec.shape),
        ]
        out_specs = pl.BlockSpec((qblk, D), lambda i: (i, 0))

        in_bytes = (x.nbytes + self.wqkv3.nbytes + self.bqkv3.nbytes
                    + self.wo3.nbytes + self.w1t.nbytes + self.w2t.nbytes
                    + self.pvec.nbytes)
        gsteps = B // qblk
        flops = (gsteps * 2 * B * D * 2 * D      # K/V projection (per grid step)
                 + 2 * B * D * D                 # Q projection
                 + 4 * H * B * B * hd            # scores + prob @ V
                 + 2 * B * D * D                 # output projection
                 + 4 * B * D * D)                # feed-forward
        cost = pl.CostEstimate(
            flops=int(flops),
            transcendentals=int(H * B * B + H * B + 2 * B),
            bytes_accessed=int(gsteps * in_bytes + x.nbytes))
        vmem_limit = int(min(64 * 1024 * 1024,
                             max(32 * 1024 * 1024,
                                 4 * in_bytes + 4 * x.nbytes + (1 << 20))))

        return pl.pallas_call(
            _encoder_layer_kernel,
            out_shape=jax.ShapeDtypeStruct((B, D), x.dtype),
            grid=grid,
            in_specs=in_specs,
            out_specs=out_specs,
            compiler_params=pltpu.CompilerParams(
                dimension_semantics=("parallel",),
                vmem_limit_bytes=vmem_limit),
            cost_estimate=cost,
        )(x, self.wqkv3, self.bqkv3, self.wo3, self.w1t, self.w2t, self.pvec)

    # ------------------------------------------------------------------ pure-JAX ref
    def _reference(self, x):
        D = self.dim
        hd = D // NUM_HEADS
        q = (x @ self.wq.T + self.bq) / math.sqrt(hd)
        k = x @ self.wk.T + self.bk
        v = x @ self.wv.T + self.bv
        heads = []
        for h in range(NUM_HEADS):
            sl = slice(h * hd, (h + 1) * hd)
            s = q[:, sl] @ k[:, sl].T
            p = jax.nn.softmax(s, axis=-1)
            heads.append(p @ v[:, sl])
        attn = jnp.concatenate(heads, axis=-1) @ self.wo.T + self.bo
        y = x + attn
        y = ((y - y.mean(-1, keepdims=True))
             * jax.lax.rsqrt(y.var(-1, keepdims=True) + LN_EPS)) * self.g1 + self.be1
        ff = jnp.maximum(y @ self.w1.T + self.b1, 0.0) @ self.w2.T + self.b2
        z = y + ff
        z = ((z - z.mean(-1, keepdims=True))
             * jax.lax.rsqrt(z.var(-1, keepdims=True) + LN_EPS)) * self.g2 + self.be2
        return z

    # ------------------------------------------------------------------ forward
    def forward(self, feature, targets):
        if self.add_bf or self.eval_global > 0:
            # unsqueeze(1)/squeeze(1) collapse to working directly on (B, D)
            feature = self._encoder_layer(feature)
            return (feature, targets)
        return (feature, targets)

    __call__ = forward


if __name__ == "__main__":
    B, D = 8, 32
    key = jax.random.PRNGKey(0)
    k_feat, _ = jax.random.split(key)
    feature = jax.random.normal(k_feat, (B, D), jnp.float32)
    targets = jnp.arange(B, dtype=jnp.int32)

    model = TransformerDecorator(add_bf=True, dim=D, eval_global=0, seed=0)
    out_feature, out_targets = model(feature, targets)
    jax.block_until_ready(out_feature)
    jax.block_until_ready(out_targets)

    assert out_feature.shape == (B, D)
    assert out_targets.shape == (B,)

    # sanity check against a pure-JAX f32 reference (loose tol: bf16 MXU weight
    # inputs + approx EUP reciprocal in the kernel softmax)
    ref = model._reference(feature)
    assert bool(jnp.all(jnp.isfinite(out_feature)))
    err = float(jnp.max(jnp.abs(out_feature - ref)))
    assert bool(jnp.allclose(out_feature, ref, atol=5e-2, rtol=5e-2)), err

    print("KERNEL_OK")
</pallas_src>

<mosaic_0001>
module attributes {stable_mosaic.version = 11 : i64} {
  func.func @_encoder_layer_kernel(%arg0: i32, %arg1: memref<8x32xf32, #tpu.memory_space<vmem>>, %arg2: memref<12x32x8xbf16, #tpu.memory_space<vmem>>, %arg3: memref<12x1x8xf32, #tpu.memory_space<vmem>>, %arg4: memref<4x8x32xbf16, #tpu.memory_space<vmem>>, %arg5: memref<32x32xbf16, #tpu.memory_space<vmem>>, %arg6: memref<32x32xbf16, #tpu.memory_space<vmem>>, %arg7: memref<8x32xf32, #tpu.memory_space<vmem>>, %arg8: memref<8x32xf32, #tpu.memory_space<vmem>>) attributes {dimension_semantics = [#tpu.dimension_semantics<parallel>], iteration_bounds = array<i64: 1>, scalar_prefetch = 0 : i64, scratch_operands = 0 : i64, tpu.core_type = #tpu.core_type<tc>, window_params = [{pipeline_mode = #tpu.pipeline_mode<synchronous>, transform_indices = @transform_0, window_bounds = array<i64: 8, 32>}, {pipeline_mode = #tpu.pipeline_mode<synchronous>, transform_indices = @transform_1, window_bounds = array<i64: 12, 32, 8>}, {pipeline_mode = #tpu.pipeline_mode<synchronous>, transform_indices = @transform_2, window_bounds = array<i64: 12, 1, 8>}, {pipeline_mode = #tpu.pipeline_mode<synchronous>, transform_indices = @transform_3, window_bounds = array<i64: 4, 8, 32>}, {pipeline_mode = #tpu.pipeline_mode<synchronous>, transform_indices = @transform_4, window_bounds = array<i64: 32, 32>}, {pipeline_mode = #tpu.pipeline_mode<synchronous>, transform_indices = @transform_5, window_bounds = array<i64: 32, 32>}, {pipeline_mode = #tpu.pipeline_mode<synchronous>, transform_indices = @transform_6, window_bounds = array<i64: 8, 32>}, {transform_indices = @transform_7, window_bounds = array<i64: 8, 32>}]} {
    %c8_i32 = arith.constant 8 : i32
    %0 = arith.muli %arg0, %c8_i32 : i32
    %1 = tpu.assume_multiple %0, 8 : i32
    %2 = arith.index_cast %1 : i32 to index
    %c0 = arith.constant 0 : index
    %3 = vector.load %arg1[%2, %c0] : memref<8x32xf32, #tpu.memory_space<vmem>>, vector<8x32xf32>
    %4 = arith.truncf %3 : vector<8x32xf32> to vector<8x32xbf16>
    %c0_0 = arith.constant 0 : index
    %c0_1 = arith.constant 0 : index
    %5 = vector.load %arg1[%c0_0, %c0_1] : memref<8x32xf32, #tpu.memory_space<vmem>>, vector<8x32xf32>
    %6 = arith.truncf %5 : vector<8x32xf32> to vector<8x32xbf16>
    %c0_2 = arith.constant 0 : index
    %c0_3 = arith.constant 0 : index
    %c0_4 = arith.constant 0 : index
    %7 = vector.load %arg2[%c0_2, %c0_3, %c0_4] : memref<12x32x8xbf16, #tpu.memory_space<vmem>>, vector<12x32x8xbf16>
    %c0_5 = arith.constant 0 : index
    %c0_6 = arith.constant 0 : index
    %c0_7 = arith.constant 0 : index
    %8 = vector.load %arg3[%c0_5, %c0_6, %c0_7] : memref<12x1x8xf32, #tpu.memory_space<vmem>>, vector<12x1x8xf32>
    %c0_8 = arith.constant 0 : index
    %c0_9 = arith.constant 0 : index
    %9 = vector.load %arg7[%c0_8, %c0_9] : memref<8x32xf32, #tpu.memory_space<vmem>>, vector<8x32xf32>
    %10 = vector.shape_cast %4 : vector<8x32xbf16> to vector<1x8x32xbf16>
    %11 = vector.broadcast %10 : vector<1x8x32xbf16> to vector<4x8x32xbf16>
    %12 = vector.extract_strided_slice %7 {offsets = [0, 0, 0], sizes = [4, 32, 8], strides = [1, 1, 1]} : vector<12x32x8xbf16> to vector<4x32x8xbf16>
    %cst = arith.constant dense<0.000000e+00> : vector<4x8x8xf32>
    %13 = tpu.matmul %11, %12, %cst {dimension_numbers = #tpu.dot_dimension_numbers<[2], [1], [1], [2], [0, 0, 0, 1, 1, 2], [0], [0]>} : vector<4x8x32xbf16>, vector<4x32x8xbf16>, vector<4x8x8xf32> -> vector<4x8x8xf32>
    %14 = vector.extract_strided_slice %8 {offsets = [0, 0, 0], sizes = [4, 1, 8], strides = [1, 1, 1]} : vector<12x1x8xf32> to vector<4x1x8xf32>
    %15 = vector.broadcast %14 : vector<4x1x8xf32> to vector<4x8x8xf32>
    %16 = arith.addf %13, %15 : vector<4x8x8xf32>
    %17 = vector.shape_cast %6 : vector<8x32xbf16> to vector<1x8x32xbf16>
    %18 = vector.broadcast %17 : vector<1x8x32xbf16> to vector<8x8x32xbf16>
    %19 = vector.extract_strided_slice %7 {offsets = [4, 0, 0], sizes = [8, 32, 8], strides = [1, 1, 1]} : vector<12x32x8xbf16> to vector<8x32x8xbf16>
    %cst_10 = arith.constant dense<0.000000e+00> : vector<8x8x8xf32>
    %20 = tpu.matmul %18, %19, %cst_10 {dimension_numbers = #tpu.dot_dimension_numbers<[2], [1], [1], [2], [0, 0, 0, 1, 1, 2], [0], [0]>} : vector<8x8x32xbf16>, vector<8x32x8xbf16>, vector<8x8x8xf32> -> vector<8x8x8xf32>
    %21 = vector.extract_strided_slice %8 {offsets = [4, 0, 0], sizes = [8, 1, 8], strides = [1, 1, 1]} : vector<12x1x8xf32> to vector<8x1x8xf32>
    %22 = vector.broadcast %21 : vector<8x1x8xf32> to vector<8x8x8xf32>
    %23 = arith.addf %20, %22 : vector<8x8x8xf32>
    %24 = vector.extract_strided_slice %23 {offsets = [0, 0, 0], sizes = [4, 8, 8], strides = [1, 1, 1]} : vector<8x8x8xf32> to vector<4x8x8xf32>
    %25 = vector.extract_strided_slice %23 {offsets = [4, 0, 0], sizes = [4, 8, 8], strides = [1, 1, 1]} : vector<8x8x8xf32> to vector<4x8x8xf32>
    %cst_11 = arith.constant dense<0.000000e+00> : vector<4x8x8xf32>
    %26 = tpu.matmul %16, %24, %cst_11 {dimension_numbers = #tpu.dot_dimension_numbers<[2], [2], [1], [1], [0, 0, 0, 1, 1, 1], [0], [0]>} : vector<4x8x8xf32>, vector<4x8x8xf32>, vector<4x8x8xf32> -> vector<4x8x8xf32>
    %cst_12 = arith.constant dense<0xFF800000> : vector<4x8xf32>
    %27 = vector.multi_reduction <maximumf>, %26, %cst_12 [2] : vector<4x8x8xf32> to vector<4x8xf32>
    %28 = vector.shape_cast %27 : vector<4x8xf32> to vector<4x8x1xf32>
    %29 = vector.broadcast %28 : vector<4x8x1xf32> to vector<4x8x8xf32>
    %30 = arith.subf %26, %29 : vector<4x8x8xf32>
    %31 = math.exp %30 : vector<4x8x8xf32>
    %cst_13 = arith.constant dense<0.000000e+00> : vector<4x8xf32>
    %32 = vector.multi_reduction <add>, %31, %cst_13 [2] : vector<4x8x8xf32> to vector<4x8xf32>
    %33 = vector.shape_cast %32 : vector<4x8xf32> to vector<4x8x1xf32>
    %34 = tpu.reciprocal %33 {approx = true} : vector<4x8x1xf32> -> vector<4x8x1xf32>
    %35 = vector.broadcast %34 : vector<4x8x1xf32> to vector<4x8x8xf32>
    %36 = arith.mulf %31, %35 : vector<4x8x8xf32>
    %cst_14 = arith.constant dense<0.000000e+00> : vector<4x8x8xf32>
    %37 = tpu.matmul %36, %25, %cst_14 {dimension_numbers = #tpu.dot_dimension_numbers<[2], [1], [1], [2], [0, 0, 0, 1, 1, 2], [0], [0]>} : vector<4x8x8xf32>, vector<4x8x8xf32>, vector<4x8x8xf32> -> vector<4x8x8xf32>
    %38 = arith.truncf %37 : vector<4x8x8xf32> to vector<4x8x8xbf16>
    %c0_15 = arith.constant 0 : index
    %c0_16 = arith.constant 0 : index
    %c0_17 = arith.constant 0 : index
    %39 = vector.load %arg4[%c0_15, %c0_16, %c0_17] : memref<4x8x32xbf16, #tpu.memory_space<vmem>>, vector<4x8x32xbf16>
    %cst_18 = arith.constant dense<0.000000e+00> : vector<4x8x32xf32>
    %40 = tpu.matmul %38, %39, %cst_18 {dimension_numbers = #tpu.dot_dimension_numbers<[2], [1], [1], [2], [0, 0, 0, 1, 1, 2], [0], [0]>} : vector<4x8x8xbf16>, vector<4x8x32xbf16>, vector<4x8x32xf32> -> vector<4x8x32xf32>
    %cst_19 = arith.constant dense<0.000000e+00> : vector<8x32xf32>
    %41 = vector.multi_reduction <add>, %40, %cst_19 [0] : vector<4x8x32xf32> to vector<8x32xf32>
    %42 = vector.extract_strided_slice %9 {offsets = [0, 0], sizes = [1, 32], strides = [1, 1]} : vector<8x32xf32> to vector<1x32xf32>
    %43 = vector.broadcast %42 : vector<1x32xf32> to vector<8x32xf32>
    %44 = arith.addf %41, %43 : vector<8x32xf32>
    %45 = arith.addf %3, %44 : vector<8x32xf32>
    %cst_20 = arith.constant dense<0.000000e+00> : vector<8xf32>
    %46 = vector.multi_reduction <add>, %45, %cst_20 [1] : vector<8x32xf32> to vector<8xf32>
    %47 = vector.shape_cast %46 : vector<8xf32> to vector<8x1xf32>
    %cst_21 = arith.constant 3.125000e-02 : f32
    %48 = vector.broadcast %cst_21 : f32 to vector<8x1xf32>
    %49 = arith.mulf %47, %48 : vector<8x1xf32>
    %50 = arith.mulf %45, %45 : vector<8x32xf32>
    %cst_22 = arith.constant dense<0.000000e+00> : vector<8xf32>
    %51 = vector.multi_reduction <add>, %50, %cst_22 [1] : vector<8x32xf32> to vector<8xf32>
    %52 = vector.shape_cast %51 : vector<8xf32> to vector<8x1xf32>
    %cst_23 = arith.constant 3.125000e-02 : f32
    %53 = vector.broadcast %cst_23 : f32 to vector<8x1xf32>
    %54 = arith.mulf %52, %53 : vector<8x1xf32>
    %55 = vector.broadcast %49 : vector<8x1xf32> to vector<8x32xf32>
    %56 = arith.subf %45, %55 : vector<8x32xf32>
    %57 = arith.mulf %49, %49 : vector<8x1xf32>
    %58 = arith.subf %54, %57 : vector<8x1xf32>
    %cst_24 = arith.constant 9.99999974E-6 : f32
    %59 = vector.broadcast %cst_24 : f32 to vector<8x1xf32>
    %60 = arith.addf %58, %59 : vector<8x1xf32>
    %61 = math.rsqrt %60 : vector<8x1xf32>
    %62 = vector.broadcast %61 : vector<8x1xf32> to vector<8x32xf32>
    %63 = arith.mulf %56, %62 : vector<8x32xf32>
    %64 = vector.extract_strided_slice %9 {offsets = [1, 0], sizes = [1, 32], strides = [1, 1]} : vector<8x32xf32> to vector<1x32xf32>
    %65 = vector.broadcast %64 : vector<1x32xf32> to vector<8x32xf32>
    %66 = arith.mulf %63, %65 : vector<8x32xf32>
    %67 = vector.extract_strided_slice %9 {offsets = [2, 0], sizes = [1, 32], strides = [1, 1]} : vector<8x32xf32> to vector<1x32xf32>
    %68 = vector.broadcast %67 : vector<1x32xf32> to vector<8x32xf32>
    %69 = arith.addf %66, %68 : vector<8x32xf32>
    %70 = arith.truncf %69 : vector<8x32xf32> to vector<8x32xbf16>
    %c0_25 = arith.constant 0 : index
    %c0_26 = arith.constant 0 : index
    %71 = vector.load %arg5[%c0_25, %c0_26] : memref<32x32xbf16, #tpu.memory_space<vmem>>, vector<32x32xbf16>
    %cst_27 = arith.constant dense<0.000000e+00> : vector<8x32xf32>
    %72 = tpu.matmul %70, %71, %cst_27 {dimension_numbers = #tpu.dot_dimension_numbers<[1], [0], [0], [1], [0, 0, 1, 1], [], []>} : vector<8x32xbf16>, vector<32x32xbf16>, vector<8x32xf32> -> vector<8x32xf32>
    %73 = vector.extract_strided_slice %9 {offsets = [3, 0], sizes = [1, 32], strides = [1, 1]} : vector<8x32xf32> to vector<1x32xf32>
    %74 = vector.broadcast %73 : vector<1x32xf32> to vector<8x32xf32>
    %75 = arith.addf %72, %74 : vector<8x32xf32>
    %cst_28 = arith.constant 0.000000e+00 : f32
    %76 = vector.broadcast %cst_28 : f32 to vector<8x32xf32>
    %77 = arith.maximumf %75, %76 : vector<8x32xf32>
    %78 = arith.truncf %77 : vector<8x32xf32> to vector<8x32xbf16>
    %c0_29 = arith.constant 0 : index
    %c0_30 = arith.constant 0 : index
    %79 = vector.load %arg6[%c0_29, %c0_30] : memref<32x32xbf16, #tpu.memory_space<vmem>>, vector<32x32xbf16>
    %cst_31 = arith.constant dense<0.000000e+00> : vector<8x32xf32>
    %80 = tpu.matmul %78, %79, %cst_31 {dimension_numbers = #tpu.dot_dimension_numbers<[1], [0], [0], [1], [0, 0, 1, 1], [], []>} : vector<8x32xbf16>, vector<32x32xbf16>, vector<8x32xf32> -> vector<8x32xf32>
    %81 = vector.extract_strided_slice %9 {offsets = [4, 0], sizes = [1, 32], strides = [1, 1]} : vector<8x32xf32> to vector<1x32xf32>
    %82 = vector.broadcast %81 : vector<1x32xf32> to vector<8x32xf32>
    %83 = arith.addf %80, %82 : vector<8x32xf32>
    %84 = arith.addf %69, %83 : vector<8x32xf32>
    %cst_32 = arith.constant dense<0.000000e+00> : vector<8xf32>
    %85 = vector.multi_reduction <add>, %84, %cst_32 [1] : vector<8x32xf32> to vector<8xf32>
    %86 = vector.shape_cast %85 : vector<8xf32> to vector<8x1xf32>
    %cst_33 = arith.constant 3.125000e-02 : f32
    %87 = vector.broadcast %cst_33 : f32 to vector<8x1xf32>
    %88 = arith.mulf %86, %87 : vector<8x1xf32>
    %89 = arith.mulf %84, %84 : vector<8x32xf32>
    %cst_34 = arith.constant dense<0.000000e+00> : vector<8xf32>
    %90 = vector.multi_reduction <add>, %89, %cst_34 [1] : vector<8x32xf32> to vector<8xf32>
    %91 = vector.shape_cast %90 : vector<8xf32> to vector<8x1xf32>
    %cst_35 = arith.constant 3.125000e-02 : f32
    %92 = vector.broadcast %cst_35 : f32 to vector<8x1xf32>
    %93 = arith.mulf %91, %92 : vector<8x1xf32>
    %94 = vector.broadcast %88 : vector<8x1xf32> to vector<8x32xf32>
    %95 = arith.subf %84, %94 : vector<8x32xf32>
    %96 = arith.mulf %88, %88 : vector<8x1xf32>
    %97 = arith.subf %93, %96 : vector<8x1xf32>
    %cst_36 = arith.constant 9.99999974E-6 : f32
    %98 = vector.broadcast %cst_36 : f32 to vector<8x1xf32>
    %99 = arith.addf %97, %98 : vector<8x1xf32>
    %100 = math.rsqrt %99 : vector<8x1xf32>
    %101 = vector.broadcast %100 : vector<8x1xf32> to vector<8x32xf32>
    %102 = arith.mulf %95, %101 : vector<8x32xf32>
    %103 = vector.extract_strided_slice %9 {offsets = [5, 0], sizes = [1, 32], strides = [1, 1]} : vector<8x32xf32> to vector<1x32xf32>
    %104 = vector.broadcast %103 : vector<1x32xf32> to vector<8x32xf32>
    %105 = arith.mulf %102, %104 : vector<8x32xf32>
    %106 = vector.extract_strided_slice %9 {offsets = [6, 0], sizes = [1, 32], strides = [1, 1]} : vector<8x32xf32> to vector<1x32xf32>
    %107 = vector.broadcast %106 : vector<1x32xf32> to vector<8x32xf32>
    %108 = arith.addf %105, %107 : vector<8x32xf32>
    %c0_37 = arith.constant 0 : index
    %c0_38 = arith.constant 0 : index
    %109 = vector.load %arg8[%c0_37, %c0_38] : memref<8x32xf32, #tpu.memory_space<vmem>>, vector<8x32xf32>
    tpu.vector_store %arg8[%c0_37, %c0_38], %108 {strides = array<i32>} : memref<8x32xf32, #tpu.memory_space<vmem>>, vector<8x32xf32>,
    return
  }
  func.func @transform_0(%arg0: i32) -> (i32, i32) {
    %c0_i32 = arith.constant 0 : i32
    %c0_i32_0 = arith.constant 0 : i32
    %c0_i32_1 = arith.constant 0 : i32
    return %c0_i32, %c0_i32_0 : i32, i32
  }
  func.func @transform_1(%arg0: i32) -> (i32, i32, i32) {
    %c0_i32 = arith.constant 0 : i32
    %c0_i32_0 = arith.constant 0 : i32
    %c0_i32_1 = arith.constant 0 : i32
    %c0_i32_2 = arith.constant 0 : i32
    return %c0_i32, %c0_i32_0, %c0_i32_1 : i32, i32, i32
  }
  func.func @transform_2(%arg0: i32) -> (i32, i32, i32) {
    %c0_i32 = arith.constant 0 : i32
    %c0_i32_0 = arith.constant 0 : i32
    %c0_i32_1 = arith.constant 0 : i32
    %c0_i32_2 = arith.constant 0 : i32
    return %c0_i32, %c0_i32_0, %c0_i32_1 : i32, i32, i32
  }
  func.func @transform_3(%arg0: i32) -> (i32, i32, i32) {
    %c0_i32 = arith.constant 0 : i32
    %c0_i32_0 = arith.constant 0 : i32
    %c0_i32_1 = arith.constant 0 : i32
    %c0_i32_2 = arith.constant 0 : i32
    return %c0_i32, %c0_i32_0, %c0_i32_1 : i32, i32, i32
  }
  func.func @transform_4(%arg0: i32) -> (i32, i32) {
    %c0_i32 = arith.constant 0 : i32
    %c0_i32_0 = arith.constant 0 : i32
    %c0_i32_1 = arith.constant 0 : i32
    return %c0_i32, %c0_i32_0 : i32, i32
  }
  func.func @transform_5(%arg0: i32) -> (i32, i32) {
    %c0_i32 = arith.constant 0 : i32
    %c0_i32_0 = arith.constant 0 : i32
    %c0_i32_1 = arith.constant 0 : i32
    return %c0_i32, %c0_i32_0 : i32, i32
  }
  func.func @transform_6(%arg0: i32) -> (i32, i32) {
    %c0_i32 = arith.constant 0 : i32
    %c0_i32_0 = arith.constant 0 : i32
    %c0_i32_1 = arith.constant 0 : i32
    return %c0_i32, %c0_i32_0 : i32, i32
  }
  func.func @transform_7(%arg0: i32) -> (i32, i32) {
    %c0_i32 = arith.constant 0 : i32
    %c0_i32_0 = arith.constant 0 : i32
    return %arg0, %c0_i32 : i32, i32
  }
}

</mosaic_0001>

<llo_original>
// kernel: tpu_custom_call.1
$region0: #{tpu_custom_call.1}
  #allocation0 [shape = 'u32[]', space=smem, size = 0x4, offset = 0x4, fixed_abs, tag = 'smem constant byte address 0x4 - core index']
  #allocation1 [shape = 'u32[72,128]{1,0:T(1,128)}', space=vmem, size = 0x9000, scoped, tag = 'internal scratch']
  %s0 = inlined_call_operand.vmem [shape: f32[8,32], index: 0, kind: input, shape index: {}]
  %s1 = inlined_call_operand.vmem [shape: bf16[12,32,8], index: 1, kind: input, shape index: {}]
  %s2 = inlined_call_operand.vmem [shape: f32[12,1,8], index: 2, kind: input, shape index: {}]
  %s3 = inlined_call_operand.vmem [shape: bf16[4,8,32], index: 3, kind: input, shape index: {}]
  %s4 = inlined_call_operand.vmem [shape: bf16[32,32], index: 4, kind: input, shape index: {}]
  %s5 = inlined_call_operand.vmem [shape: bf16[32,32], index: 5, kind: input, shape index: {}]
  %s6 = inlined_call_operand.vmem [shape: f32[8,32], index: 6, kind: input, shape index: {}]
  %s7 = inlined_call_operand.hbm [shape: f32[8,32], index: 7, kind: output, shape index: {}]
  %s8 = sld [smem:[#allocation0]]
  $region38: #{tpu_custom_call.1} parent=0
    _
  %s10 = ssub.s32 1, %s8
  %s11 = scalar_select 0, %s10, %s8
  $region1: #{tpu_custom_call.1} parent=0
    #allocation2 [shape = 'u8[4096]{0}', space=vmem, size = 0x1000, scoped, tag = 'output window, operand 0, single buffered']
    #allocation3 [shape = 's32[1]{0}', space=sflag, size = 0x4, scoped, tag = 'scoped memory for tpu_custom_call.1']
    %12 = vsyncpa [#allocation3], 0
    // Predicated region
    $region2: #{tpu_custom_call.1} parent=1 // pred_check
      _
    $region3: #{tpu_custom_call.1} parent=1 // pred_check_branch
      %14 = sbr.rel (0) target = $region5
    $region4: #{tpu_custom_call.1} parent=1 // pred_region
      _
    $region5: #{tpu_custom_call.1} parent=1 // pred_fallthru
      _
    // Predicated region
    $region6: #{tpu_custom_call.1} parent=1 // pred_check
      _
    $region7: #{tpu_custom_call.1} parent=1 // pred_check_branch
      %16 = sbr.rel (0) target = $region9
    $region8: #{tpu_custom_call.1} parent=1 // pred_region
      _
    $region9: #{tpu_custom_call.1} parent=1 // pred_fallthru
      _
    // Predicated region
    $region10: #{tpu_custom_call.1} parent=1 // pred_check
      _
    $region11: #{tpu_custom_call.1} parent=1 // pred_check_branch
      %18 = sbr.rel (0) target = $region13
    $region12: #{tpu_custom_call.1} parent=1 // pred_region
      _
    $region13: #{tpu_custom_call.1} parent=1 // pred_fallthru
      _
    // Predicated region
    $region14: #{tpu_custom_call.1} parent=1 // pred_check
      _
    $region15: #{tpu_custom_call.1} parent=1 // pred_check_branch
      %20 = sbr.rel (0) target = $region17
    $region16: #{tpu_custom_call.1} parent=1 // pred_region
      _
    $region17: #{tpu_custom_call.1} parent=1 // pred_fallthru
      _
    // Predicated region
    $region18: #{tpu_custom_call.1} parent=1 // pred_check
      _
    $region19: #{tpu_custom_call.1} parent=1 // pred_check_branch
      %22 = sbr.rel (0) target = $region21
    $region20: #{tpu_custom_call.1} parent=1 // pred_region
      _
    $region21: #{tpu_custom_call.1} parent=1 // pred_fallthru
      _
    // Predicated region
    $region22: #{tpu_custom_call.1} parent=1 // pred_check
      _
    $region23: #{tpu_custom_call.1} parent=1 // pred_check_branch
      %24 = sbr.rel (0) target = $region25
    $region24: #{tpu_custom_call.1} parent=1 // pred_region
      _
    $region25: #{tpu_custom_call.1} parent=1 // pred_fallthru
      _
    // Predicated region
    $region26: #{tpu_custom_call.1} parent=1 // pred_check
      _
    $region27: #{tpu_custom_call.1} parent=1 // pred_check_branch
      %26 = sbr.rel (0) target = $region29
    $region28: #{tpu_custom_call.1} parent=1 // pred_region
      _
    $region29: #{tpu_custom_call.1} parent=1 // pred_fallthru
      _
    %s28 = smul.u32 0, 8
    %s29 = scalar_lea.vmem %s0, %s28
    %v30 = vld [vmem:[%s29] sm:$0xff]
    %v31 = vpack.c.bf16 %v30, %v30
    %v32 = vld [vmem:[%s0] sm:$0xff]
    %v33 = vpack.c.bf16 %v32, %v32
    %v34 = vld [vmem:[%s1] sm:$0xf]
    %v35 = vld [vmem:[%s1 + $0x4] sm:$0xf]
    %v36 = vld [vmem:[%s1 + $0x8] sm:$0xf]
    %v37 = vld [vmem:[%s1 + $0xc] sm:$0xf]
    %v38 = vld [vmem:[%s1 + $0x10] sm:$0xf]
    %v39 = vld [vmem:[%s1 + $0x14] sm:$0xf]
    %v40 = vld [vmem:[%s1 + $0x18] sm:$0xf]
    %v41 = vld [vmem:[%s1 + $0x1c] sm:$0xf]
    %v42 = vld [vmem:[%s1 + $0x20] sm:$0xf]
    %v43 = vld [vmem:[%s1 + $0x24] sm:$0xf]
    %v44 = vld [vmem:[%s1 + $0x28] sm:$0xf]
    %v45 = vld [vmem:[%s1 + $0x2c] sm:$0xf]
    %v46 = vld [vmem:[%s1 + $0x30] sm:$0xf]
    %v47 = vld [vmem:[%s1 + $0x34] sm:$0xf]
    %v48 = vld [vmem:[%s1 + $0x38] sm:$0xf]
    %v49 = vld [vmem:[%s1 + $0x3c] sm:$0xf]
    %v50 = vld [vmem:[%s1 + $0x40] sm:$0xf]
    %v51 = vld [vmem:[%s1 + $0x44] sm:$0xf]
    %v52 = vld [vmem:[%s1 + $0x48] sm:$0xf]
    %v53 = vld [vmem:[%s1 + $0x4c] sm:$0xf]
    %v54 = vld [vmem:[%s1 + $0x50] sm:$0xf]
    %v55 = vld [vmem:[%s1 + $0x54] sm:$0xf]
    %v56 = vld [vmem:[%s1 + $0x58] sm:$0xf]
    %v57 = vld [vmem:[%s1 + $0x5c] sm:$0xf]
    %v58 = vld [vmem:[%s1 + $0x60] sm:$0xf]
    %v59 = vld [vmem:[%s1 + $0x64] sm:$0xf]
    %v60 = vld [vmem:[%s1 + $0x68] sm:$0xf]
    %v61 = vld [vmem:[%s1 + $0x6c] sm:$0xf]
    %v62 = vld [vmem:[%s1 + $0x70] sm:$0xf]
    %v63 = vld [vmem:[%s1 + $0x74] sm:$0xf]
    %v64 = vld [vmem:[%s1 + $0x78] sm:$0xf]
    %v65 = vld [vmem:[%s1 + $0x7c] sm:$0xf]
    %v66 = vld [vmem:[%s1 + $0x80] sm:$0xf]
    %v67 = vld [vmem:[%s1 + $0x84] sm:$0xf]
    %v68 = vld [vmem:[%s1 + $0x88] sm:$0xf]
    %v69 = vld [vmem:[%s1 + $0x8c] sm:$0xf]
    %v70 = vld [vmem:[%s1 + $0x90] sm:$0xf]
    %v71 = vld [vmem:[%s1 + $0x94] sm:$0xf]
    %v72 = vld [vmem:[%s1 + $0x98] sm:$0xf]
    %v73 = vld [vmem:[%s1 + $0x9c] sm:$0xf]
    %v74 = vld [vmem:[%s1 + $0xa0] sm:$0xf]
    %v75 = vld [vmem:[%s1 + $0xa4] sm:$0xf]
    %v76 = vld [vmem:[%s1 + $0xa8] sm:$0xf]
    %v77 = vld [vmem:[%s1 + $0xac] sm:$0xf]
    %v78 = vld [vmem:[%s1 + $0xb0] sm:$0xf]
    %v79 = vld [vmem:[%s1 + $0xb4] sm:$0xf]
    %v80 = vld [vmem:[%s1 + $0xb8] sm:$0xf]
    %v81 = vld [vmem:[%s1 + $0xbc] sm:$0xf]
    %v82 = vld [vmem:[%s2] sm:$0x1]
    %v83 = vld [vmem:[%s2 + $0x1] sm:$0x1]
    %v84 = vld [vmem:[%s2 + $0x2] sm:$0x1]
    %v85 = vld [vmem:[%s2 + $0x3] sm:$0x1]
    %v86 = vld [vmem:[%s2 + $0x4] sm:$0x1]
    %v87 = vld [vmem:[%s2 + $0x5] sm:$0x1]
    %v88 = vld [vmem:[%s2 + $0x6] sm:$0x1]
    %v89 = vld [vmem:[%s2 + $0x7] sm:$0x1]
    %v90 = vld [vmem:[%s2 + $0x8] sm:$0x1]
    %v91 = vld [vmem:[%s2 + $0x9] sm:$0x1]
    %v92 = vld [vmem:[%s2 + $0xa] sm:$0x1]
    %v93 = vld [vmem:[%s2 + $0xb] sm:$0x1]
    %v94 = vld [vmem:[%s6] sm:$0xff]
    %v99 = vperm.slane %v82, 0
    %v100 = vperm.slane %v83, 0
    %v101 = vperm.slane %v84, 0
    %v102 = vperm.slane %v85, 0
    %v111 = vunpack.c.l.b16 %v34
    %v112 = vunpack.c.l.b16 %v35
    %v113 = vunpack.c.l.b16 %v36
    %v114 = vunpack.c.l.b16 %v37
    %v115 = vpack.c.b16 %v112, %v111
    %v116 = vpack.c.b16 %v114, %v113
    %vm119 = vcmask 261120
    %v121 = vsel %vm119, %v31, 0
    %123 = vmatpush.bf16.msra.mxu0 0
    %124 = vmatpush.bf16.msra.mxu0 0
    %125 = vmatpush.bf16.msra.mxu0 0
    %126 = vmatpush.bf16.msra.mxu0 0
    %127 = vmatpush.bf16.msra.mxu0 0
    %128 = vmatpush.bf16.msra.mxu0 0
    %129 = vmatpush.bf16.msra.mxu0 %v116
    %130 = vmatpush.bf16.msra.mxu0 %v115
    %131 = vmatmul.bf16.gmra.mxu0 %v121
    %v132 = vpop.f32.mrf.mxu0
    %v133 = vadd.f32 %v99, %v132
    %v134 = vpop.f32.mrf.mxu0
    %135 = vdwg.mxu0
    %v140 = vunpack.c.l.b16 %v38
    %v141 = vunpack.c.l.b16 %v39
    %v142 = vunpack.c.l.b16 %v40
    %v143 = vunpack.c.l.b16 %v41
    %v144 = vpack.c.b16 %v141, %v140
    %v145 = vpack.c.b16 %v143, %v142
    %148 = vmatpush.bf16.msra.mxu0 0
    %149 = vmatpush.bf16.msra.mxu0 0
    %150 = vmatpush.bf16.msra.mxu0 0
    %151 = vmatpush.bf16.msra.mxu0 0
    %152 = vmatpush.bf16.msra.mxu0 0
    %153 = vmatpush.bf16.msra.mxu0 0
    %154 = vmatpush.bf16.msra.mxu0 %v145
    %155 = vmatpush.bf16.msra.mxu0 %v144
    %156 = vmatmul.bf16.gmra.mxu0 %v121
    %v157 = vpop.f32.mrf.mxu0
    %v158 = vadd.f32 %v100, %v157
    %v159 = vpop.f32.mrf.mxu0
    %160 = vdwg.mxu0
    %v165 = vunpack.c.l.b16 %v42
    %v166 = vunpack.c.l.b16 %v43
    %v167 = vunpack.c.l.b16 %v44
    %v168 = vunpack.c.l.b16 %v45
    %v169 = vpack.c.b16 %v166, %v165
    %v170 = vpack.c.b16 %v168, %v167
    %173 = vmatpush.bf16.msra.mxu0 0
    %174 = vmatpush.bf16.msra.mxu0 0
    %175 = vmatpush.bf16.msra.mxu0 0
    %176 = vmatpush.bf16.msra.mxu0 0
    %177 = vmatpush.bf16.msra.mxu0 0
    %178 = vmatpush.bf16.msra.mxu0 0
    %179 = vmatpush.bf16.msra.mxu0 %v170
    %180 = vmatpush.bf16.msra.mxu0 %v169
    %181 = vmatmul.bf16.gmra.mxu0 %v121
    %v182 = vpop.f32.mrf.mxu0
    %v183 = vadd.f32 %v101, %v182
    %v184 = vpop.f32.mrf.mxu0
    %185 = vdwg.mxu0
    %v190 = vunpack.c.l.b16 %v46
    %v191 = vunpack.c.l.b16 %v47
    %v192 = vunpack.c.l.b16 %v48
    %v193 = vunpack.c.l.b16 %v49
    %v194 = vpack.c.b16 %v191, %v190
    %v195 = vpack.c.b16 %v193, %v192
    %198 = vmatpush.bf16.msra.mxu0 0
    %199 = vmatpush.bf16.msra.mxu0 0
    %200 = vmatpush.bf16.msra.mxu0 0
    %201 = vmatpush.bf16.msra.mxu0 0
    %202 = vmatpush.bf16.msra.mxu0 0
    %203 = vmatpush.bf16.msra.mxu0 0
    %204 = vmatpush.bf16.msra.mxu0 %v195
    %205 = vmatpush.bf16.msra.mxu0 %v194
    %206 = vmatmul.bf16.gmra.mxu0 %v121
    %v207 = vpop.f32.mrf.mxu0
    %v208 = vadd.f32 %v102, %v207
    %v209 = vpop.f32.mrf.mxu0
    %210 = vdwg.mxu0
    %v219 = vperm.slane %v86, 0
    %v220 = vperm.slane %v87, 0
    %v221 = vperm.slane %v88, 0
    %v222 = vperm.slane %v89, 0
    %v223 = vperm.slane %v90, 0
    %v224 = vperm.slane %v91, 0
    %v225 = vperm.slane %v92, 0
    %v226 = vperm.slane %v93, 0
    %v239 = vunpack.c.l.b16 %v50
    %v240 = vunpack.c.l.b16 %v51
    %v241 = vunpack.c.l.b16 %v52
    %v242 = vunpack.c.l.b16 %v53
    %v243 = vpack.c.b16 %v240, %v239
    %v244 = vpack.c.b16 %v242, %v241
    %v248 = vsel %vm119, %v33, 0
    %250 = vmatpush.bf16.msra.mxu0 0
    %251 = vmatpush.bf16.msra.mxu0 0
    %252 = vmatpush.bf16.msra.mxu0 0
    %253 = vmatpush.bf16.msra.mxu0 0
    %254 = vmatpush.bf16.msra.mxu0 0
    %255 = vmatpush.bf16.msra.mxu0 0
    %256 = vmatpush.bf16.msra.mxu0 %v244
    %257 = vmatpush.bf16.msra.mxu0 %v243
    %258 = vmatmul.bf16.gmra.mxu0 %v248
    %v259 = vpop.f32.mrf.mxu0
    %v260 = vadd.f32 %v219, %v259
    %v261 = vpop.f32.mrf.mxu0
    %262 = vdwg.mxu0
    %v267 = vunpack.c.l.b16 %v54
    %v268 = vunpack.c.l.b16 %v55
    %v269 = vunpack.c.l.b16 %v56
    %v270 = vunpack.c.l.b16 %v57
    %v271 = vpack.c.b16 %v268, %v267
    %v272 = vpack.c.b16 %v270, %v269
    %275 = vmatpush.bf16.msra.mxu0 0
    %276 = vmatpush.bf16.msra.mxu0 0
    %277 = vmatpush.bf16.msra.mxu0 0
    %278 = vmatpush.bf16.msra.mxu0 0
    %279 = vmatpush.bf16.msra.mxu0 0
    %280 = vmatpush.bf16.msra.mxu0 0
    %281 = vmatpush.bf16.msra.mxu0 %v272
    %282 = vmatpush.bf16.msra.mxu0 %v271
    %283 = vmatmul.bf16.gmra.mxu0 %v248
    %v284 = vpop.f32.mrf.mxu0
    %v285 = vadd.f32 %v220, %v284
    %v286 = vpop.f32.mrf.mxu0
    %287 = vdwg.mxu0
    %v292 = vunpack.c.l.b16 %v58
    %v293 = vunpack.c.l.b16 %v59
    %v294 = vunpack.c.l.b16 %v60
    %v295 = vunpack.c.l.b16 %v61
    %v296 = vpack.c.b16 %v293, %v292
    %v297 = vpack.c.b16 %v295, %v294
    %300 = vmatpush.bf16.msra.mxu0 0
    %301 = vmatpush.bf16.msra.mxu0 0
    %302 = vmatpush.bf16.msra.mxu0 0
    %303 = vmatpush.bf16.msra.mxu0 0
    %304 = vmatpush.bf16.msra.mxu0 0
    %305 = vmatpush.bf16.msra.mxu0 0
    %306 = vmatpush.bf16.msra.mxu0 %v297
    %307 = vmatpush.bf16.msra.mxu0 %v296
    %308 = vmatmul.bf16.gmra.mxu0 %v248
    %v309 = vpop.f32.mrf.mxu0
    %v310 = vadd.f32 %v221, %v309
    %v311 = vpop.f32.mrf.mxu0
    %312 = vdwg.mxu0
    %v317 = vunpack.c.l.b16 %v62
    %v318 = vunpack.c.l.b16 %v63
    %v319 = vunpack.c.l.b16 %v64
    %v320 = vunpack.c.l.b16 %v65
    %v321 = vpack.c.b16 %v318, %v317
    %v322 = vpack.c.b16 %v320, %v319
    %325 = vmatpush.bf16.msra.mxu0 0
    %326 = vmatpush.bf16.msra.mxu0 0
    %327 = vmatpush.bf16.msra.mxu0 0
    %328 = vmatpush.bf16.msra.mxu0 0
    %329 = vmatpush.bf16.msra.mxu0 0
    %330 = vmatpush.bf16.msra.mxu0 0
    %331 = vmatpush.bf16.msra.mxu0 %v322
    %332 = vmatpush.bf16.msra.mxu0 %v321
    %333 = vmatmul.bf16.gmra.mxu0 %v248
    %v334 = vpop.f32.mrf.mxu0
    %v335 = vadd.f32 %v222, %v334
    %v336 = vpop.f32.mrf.mxu0
    %337 = vdwg.mxu0
    %v342 = vunpack.c.l.b16 %v66
    %v343 = vunpack.c.l.b16 %v67
    %v344 = vunpack.c.l.b16 %v68
    %v345 = vunpack.c.l.b16 %v69
    %v346 = vpack.c.b16 %v343, %v342
    %v347 = vpack.c.b16 %v345, %v344
    %350 = vmatpush.bf16.msra.mxu0 0
    %351 = vmatpush.bf16.msra.mxu0 0
    %352 = vmatpush.bf16.msra.mxu0 0
    %353 = vmatpush.bf16.msra.mxu0 0
    %354 = vmatpush.bf16.msra.mxu0 0
    %355 = vmatpush.bf16.msra.mxu0 0
    %356 = vmatpush.bf16.msra.mxu0 %v347
    %357 = vmatpush.bf16.msra.mxu0 %v346
    %358 = vmatmul.bf16.gmra.mxu0 %v248
    %v359 = vpop.f32.mrf.mxu0
    %v360 = vadd.f32 %v223, %v359
    %v361 = vpop.f32.mrf.mxu0
    %362 = vdwg.mxu0
    %v367 = vunpack.c.l.b16 %v70
    %v368 = vunpack.c.l.b16 %v71
    %v369 = vunpack.c.l.b16 %v72
    %v370 = vunpack.c.l.b16 %v73
    %v371 = vpack.c.b16 %v368, %v367
    %v372 = vpack.c.b16 %v370, %v369
    %375 = vmatpush.bf16.msra.mxu0 0
    %376 = vmatpush.bf16.msra.mxu0 0
    %377 = vmatpush.bf16.msra.mxu0 0
    %378 = vmatpush.bf16.msra.mxu0 0
    %379 = vmatpush.bf16.msra.mxu0 0
    %380 = vmatpush.bf16.msra.mxu0 0
    %381 = vmatpush.bf16.msra.mxu0 %v372
    %382 = vmatpush.bf16.msra.mxu0 %v371
    %383 = vmatmul.bf16.gmra.mxu0 %v248
    %v384 = vpop.f32.mrf.mxu0
    %v385 = vadd.f32 %v224, %v384
    %v386 = vpop.f32.mrf.mxu0
    %387 = vdwg.mxu0
    %v392 = vunpack.c.l.b16 %v74
    %v393 = vunpack.c.l.b16 %v75
    %v394 = vunpack.c.l.b16 %v76
    %v395 = vunpack.c.l.b16 %v77
    %v396 = vpack.c.b16 %v393, %v392
    %v397 = vpack.c.b16 %v395, %v394
    %400 = vmatpush.bf16.msra.mxu0 0
    %401 = vmatpush.bf16.msra.mxu0 0
    %402 = vmatpush.bf16.msra.mxu0 0
    %403 = vmatpush.bf16.msra.mxu0 0
    %404 = vmatpush.bf16.msra.mxu0 0
    %405 = vmatpush.bf16.msra.mxu0 0
    %406 = vmatpush.bf16.msra.mxu0 %v397
    %407 = vmatpush.bf16.msra.mxu0 %v396
    %408 = vmatmul.bf16.gmra.mxu0 %v248
    %v409 = vpop.f32.mrf.mxu0
    %v410 = vadd.f32 %v225, %v409
    %v411 = vpop.f32.mrf.mxu0
    %412 = vdwg.mxu0
    %v417 = vunpack.c.l.b16 %v78
    %v418 = vunpack.c.l.b16 %v79
    %v419 = vunpack.c.l.b16 %v80
    %v420 = vunpack.c.l.b16 %v81
    %v421 = vpack.c.b16 %v418, %v417
    %v422 = vpack.c.b16 %v420, %v419
    %425 = vmatpush.bf16.msra.mxu0 0
    %426 = vmatpush.bf16.msra.mxu0 0
    %427 = vmatpush.bf16.msra.mxu0 0
    %428 = vmatpush.bf16.msra.mxu0 0
    %429 = vmatpush.bf16.msra.mxu0 0
    %430 = vmatpush.bf16.msra.mxu0 0
    %431 = vmatpush.bf16.msra.mxu0 %v422
    %432 = vmatpush.bf16.msra.mxu0 %v421
    %433 = vmatmul.bf16.gmra.mxu0 %v248
    %v434 = vpop.f32.mrf.mxu0
    %v435 = vadd.f32 %v226, %v434
    %v436 = vpop.f32.mrf.mxu0
    %437 = vdwg.mxu0
    %vm438 = vcmask 64512
    %v440 = vsel %vm438, %v133, 0
    %v443 = vsel %vm438, %v260, 0
    %445 = vmatpush.xpose.msra.mxu0 0.0
    %446 = vmatpush.xpose.msra.mxu0 0.0
    %447 = vmatpush.xpose.msra.mxu0 0.0
    %448 = vmatpush.xpose.msra.mxu0 0.0
    %449 = vmatpush.xpose.msra.mxu0 0.0
    %450 = vmatpush.xpose.msra.mxu0 0.0
    %451 = vmatpush.xpose.msra.mxu0 0.0
    %452 = vmatpush.xpose.msra.mxu0 0.0
    %453 = vmatpush.xpose.msra.mxu0 0.0
    %454 = vmatpush.xpose.msra.mxu0 0.0
    %455 = vmatpush.xpose.msra.mxu0 0.0
    %456 = vmatpush.xpose.msra.mxu0 0.0
    %457 = vmatpush.xpose.msra.mxu0 0.0
    %458 = vmatpush.xpose.msra.mxu0 0.0
    %459 = vmatpush.xpose.msra.mxu0 0.0
    %460 = vmatpush.xpose.msra.mxu0 %v443
    %461 = vmatmul.f32.gmra.mxu0 %v440
    %v462 = vpop.f32.mrf.mxu0
    %v463 = vadd.f32 0.0, %v462
    %464 = vdwg.mxu0
    %v466 = vsel %vm438, %v158, 0
    %v469 = vsel %vm438, %v285, 0
    %471 = vmatpush.xpose.msra.mxu0 0.0
    %472 = vmatpush.xpose.msra.mxu0 0.0
    %473 = vmatpush.xpose.msra.mxu0 0.0
    %474 = vmatpush.xpose.msra.mxu0 0.0
    %475 = vmatpush.xpose.msra.mxu0 0.0
    %476 = vmatpush.xpose.msra.mxu0 0.0
    %477 = vmatpush.xpose.msra.mxu0 0.0
    %478 = vmatpush.xpose.msra.mxu0 0.0
    %479 = vmatpush.xpose.msra.mxu0 0.0
    %480 = vmatpush.xpose.msra.mxu0 0.0
    %481 = vmatpush.xpose.msra.mxu0 0.0
    %482 = vmatpush.xpose.msra.mxu0 0.0
    %483 = vmatpush.xpose.msra.mxu0 0.0
    %484 = vmatpush.xpose.msra.mxu0 0.0
    %485 = vmatpush.xpose.msra.mxu0 0.0
    %486 = vmatpush.xpose.msra.mxu0 %v469
    %487 = vmatmul.f32.gmra.mxu0 %v466
    %v488 = vpop.f32.mrf.mxu0
    %v489 = vadd.f32 0.0, %v488
    %490 = vdwg.mxu0
    %v492 = vsel %vm438, %v183, 0
    %v495 = vsel %vm438, %v310, 0
    %497 = vmatpush.xpose.msra.mxu0 0.0
    %498 = vmatpush.xpose.msra.mxu0 0.0
    %499 = vmatpush.xpose.msra.mxu0 0.0
    %500 = vmatpush.xpose.msra.mxu0 0.0
    %501 = vmatpush.xpose.msra.mxu0 0.0
    %502 = vmatpush.xpose.msra.mxu0 0.0
    %503 = vmatpush.xpose.msra.mxu0 0.0
    %504 = vmatpush.xpose.msra.mxu0 0.0
    %505 = vmatpush.xpose.msra.mxu0 0.0
    %506 = vmatpush.xpose.msra.mxu0 0.0
    %507 = vmatpush.xpose.msra.mxu0 0.0
    %508 = vmatpush.xpose.msra.mxu0 0.0
    %509 = vmatpush.xpose.msra.mxu0 0.0
    %510 = vmatpush.xpose.msra.mxu0 0.0
    %511 = vmatpush.xpose.msra.mxu0 0.0
    %512 = vmatpush.xpose.msra.mxu0 %v495
    %513 = vmatmul.f32.gmra.mxu0 %v492
    %v514 = vpop.f32.mrf.mxu0
    %v515 = vadd.f32 0.0, %v514
    %516 = vdwg.mxu0
    %v518 = vsel %vm438, %v208, 0
    %v521 = vsel %vm438, %v335, 0
    %523 = vmatpush.xpose.msra.mxu0 0.0
    %524 = vmatpush.xpose.msra.mxu0 0.0
    %525 = vmatpush.xpose.msra.mxu0 0.0
    %526 = vmatpush.xpose.msra.mxu0 0.0
    %527 = vmatpush.xpose.msra.mxu0 0.0
    %528 = vmatpush.xpose.msra.mxu0 0.0
    %529 = vmatpush.xpose.msra.mxu0 0.0
    %530 = vmatpush.xpose.msra.mxu0 0.0
    %531 = vmatpush.xpose.msra.mxu0 0.0
    %532 = vmatpush.xpose.msra.mxu0 0.0
    %533 = vmatpush.xpose.msra.mxu0 0.0
    %534 = vmatpush.xpose.msra.mxu0 0.0
    %535 = vmatpush.xpose.msra.mxu0 0.0
    %536 = vmatpush.xpose.msra.mxu0 0.0
    %537 = vmatpush.xpose.msra.mxu0 0.0
    %538 = vmatpush.xpose.msra.mxu0 %v521
    %539 = vmatmul.f32.gmra.mxu0 %v518
    %v540 = vpop.f32.mrf.mxu0
    %v541 = vadd.f32 0.0, %v540
    %542 = vdwg.mxu0
    %v543 = vsel %vm438, %v463, -inf
    %544 = vmax.xlane.f32.xlu0 %v543
    %v545 = vpop.xlane.xlu0 %544
    %v546 = vsel %vm438, %v489, -inf
    %547 = vmax.xlane.f32.xlu0 %v546
    %v548 = vpop.xlane.xlu0 %547
    %v549 = vsel %vm438, %v515, -inf
    %550 = vmax.xlane.f32.xlu0 %v549
    %v551 = vpop.xlane.xlu0 %550
    %v552 = vsel %vm438, %v541, -inf
    %553 = vmax.xlane.f32.xlu0 %v552
    %v554 = vpop.xlane.xlu0 %553
    %v555 = vsub.f32 %v463, %v545
    %v556 = vsub.f32 %v489, %v548
    %v557 = vsub.f32 %v515, %v551
    %v558 = vsub.f32 %v541, %v554
    %v559 = vmul.f32 %v555, 1.442695
    %v560 = vpow.pop %v559
    %v561 = vmul.f32 %v556, 1.442695
    %v562 = vpow.pop %v561
    %v563 = vmul.f32 %v557, 1.442695
    %v564 = vpow.pop %v563
    %v565 = vmul.f32 %v558, 1.442695
    %v566 = vpow.pop %v565
    %v567 = vsel %vm438, %v560, 0.0
    %568 = vadd.xlane.f32.xlu0 %v567
    %v569 = vpop.xlane.xlu0 %568
    %v570 = vsel %vm438, %v562, 0.0
    %571 = vadd.xlane.f32.xlu0 %v570
    %v572 = vpop.xlane.xlu0 %571
    %v573 = vsel %vm438, %v564, 0.0
    %574 = vadd.xlane.f32.xlu0 %v573
    %v575 = vpop.xlane.xlu0 %574
    %v576 = vsel %vm438, %v566, 0.0
    %577 = vadd.xlane.f32.xlu0 %v576
    %v578 = vpop.xlane.xlu0 %577
    %v579 = vrcp.pop %v569
    %v580 = vrcp.pop %v572
    %v581 = vrcp.pop %v575
    %v582 = vrcp.pop %v578
    %v583 = vmul.f32 %v560, %v579
    %v584 = vmul.f32 %v562, %v580
    %v585 = vmul.f32 %v564, %v581
    %v586 = vmul.f32 %v566, %v582
    %v588 = vsel %vm438, %v583, 0
    %590 = vmatpush.msra.mxu0 0.0
    %591 = vmatpush.msra.mxu0 0.0
    %592 = vmatpush.msra.mxu0 0.0
    %593 = vmatpush.msra.mxu0 0.0
    %594 = vmatpush.msra.mxu0 0.0
    %595 = vmatpush.msra.mxu0 0.0
    %596 = vmatpush.msra.mxu0 0.0
    %597 = vmatpush.msra.mxu0 0.0
    %598 = vmatpush.msra.mxu0 0.0
    %599 = vmatpush.msra.mxu0 0.0
    %600 = vmatpush.msra.mxu0 0.0
    %601 = vmatpush.msra.mxu0 0.0
    %602 = vmatpush.msra.mxu0 0.0
    %603 = vmatpush.msra.mxu0 0.0
    %604 = vmatpush.msra.mxu0 0.0
    %605 = vmatpush.msra.mxu0 %v360
    %606 = vmatmul.f32.gmra.mxu0 %v588
    %v607 = vpop.f32.mrf.mxu0
    %v608 = vadd.f32 0.0, %v607
    %609 = vdwg.mxu0
    %v611 = vsel %vm438, %v584, 0
    %613 = vmatpush.msra.mxu0 0.0
    %614 = vmatpush.msra.mxu0 0.0
    %615 = vmatpush.msra.mxu0 0.0
    %616 = vmatpush.msra.mxu0 0.0
    %617 = vmatpush.msra.mxu0 0.0
    %618 = vmatpush.msra.mxu0 0.0
    %619 = vmatpush.msra.mxu0 0.0
    %620 = vmatpush.msra.mxu0 0.0
    %621 = vmatpush.msra.mxu0 0.0
    %622 = vmatpush.msra.mxu0 0.0
    %623 = vmatpush.msra.mxu0 0.0
    %624 = vmatpush.msra.mxu0 0.0
    %625 = vmatpush.msra.mxu0 0.0
    %626 = vmatpush.msra.mxu0 0.0
    %627 = vmatpush.msra.mxu0 0.0
    %628 = vmatpush.msra.mxu0 %v385
    %629 = vmatmul.f32.gmra.mxu0 %v611
    %v630 = vpop.f32.mrf.mxu0
    %v631 = vadd.f32 0.0, %v630
    %632 = vdwg.mxu0
    %v634 = vsel %vm438, %v585, 0
    %636 = vmatpush.msra.mxu0 0.0
    %637 = vmatpush.msra.mxu0 0.0
    %638 = vmatpush.msra.mxu0 0.0
    %639 = vmatpush.msra.mxu0 0.0
    %640 = vmatpush.msra.mxu0 0.0
    %641 = vmatpush.msra.mxu0 0.0
    %642 = vmatpush.msra.mxu0 0.0
    %643 = vmatpush.msra.mxu0 0.0
    %644 = vmatpush.msra.mxu0 0.0
    %645 = vmatpush.msra.mxu0 0.0
    %646 = vmatpush.msra.mxu0 0.0
    %647 = vmatpush.msra.mxu0 0.0
    %648 = vmatpush.msra.mxu0 0.0
    %649 = vmatpush.msra.mxu0 0.0
    %650 = vmatpush.msra.mxu0 0.0
    %651 = vmatpush.msra.mxu0 %v410
    %652 = vmatmul.f32.gmra.mxu0 %v634
    %v653 = vpop.f32.mrf.mxu0
    %v654 = vadd.f32 0.0, %v653
    %655 = vdwg.mxu0
    %v657 = vsel %vm438, %v586, 0
    %659 = vmatpush.msra.mxu0 0.0
    %660 = vmatpush.msra.mxu0 0.0
    %661 = vmatpush.msra.mxu0 0.0
    %662 = vmatpush.msra.mxu0 0.0
    %663 = vmatpush.msra.mxu0 0.0
    %664 = vmatpush.msra.mxu0 0.0
    %665 = vmatpush.msra.mxu0 0.0
    %666 = vmatpush.msra.mxu0 0.0
    %667 = vmatpush.msra.mxu0 0.0
    %668 = vmatpush.msra.mxu0 0.0
    %669 = vmatpush.msra.mxu0 0.0
    %670 = vmatpush.msra.mxu0 0.0
    %671 = vmatpush.msra.mxu0 0.0
    %672 = vmatpush.msra.mxu0 0.0
    %673 = vmatpush.msra.mxu0 0.0
    %674 = vmatpush.msra.mxu0 %v435
    %675 = vmatmul.f32.gmra.mxu0 %v657
    %v676 = vpop.f32.mrf.mxu0
    %v677 = vadd.f32 0.0, %v676
    %678 = vdwg.mxu0
    %v679 = vpack.c.bf16 %v608, %v608
    %v680 = vpack.c.bf16 %v631, %v631
    %v681 = vpack.c.bf16 %v654, %v654
    %v682 = vpack.c.bf16 %v677, %v677
    %v683 = vld [vmem:[%s3] sm:$0xf]
    %v684 = vld [vmem:[%s3 + $0x4] sm:$0xf]
    %v685 = vld [vmem:[%s3 + $0x8] sm:$0xf]
    %v686 = vld [vmem:[%s3 + $0xc] sm:$0xf]
    %v688 = vsel %vm438, %v679, 0
    %vm690 = vcmask 1043456
    %v692 = vsel %vm690, %v683, 0
    %694 = vmatpush.bf16.msra.mxu0 0
    %695 = vmatpush.bf16.msra.mxu0 0
    %696 = vmatpush.bf16.msra.mxu0 0
    %697 = vmatpush.bf16.msra.mxu0 0
    %698 = vmatpush.bf16.msra.mxu0 0
    %699 = vmatpush.bf16.msra.mxu0 0
    %700 = vmatpush.bf16.msra.mxu0 0
    %701 = vmatpush.bf16.msra.mxu0 %v692
    %702 = vmatmul.bf16.gmra.mxu0 %v688
    %v703 = vpop.f32.mrf.mxu0
    %v704 = vadd.f32 0.0, %v703
    %v705 = vpop.f32.mrf.mxu0
    %706 = vdwg.mxu0
    %v708 = vsel %vm438, %v680, 0
    %v711 = vsel %vm690, %v684, 0
    %713 = vmatpush.bf16.msra.mxu0 0
    %714 = vmatpush.bf16.msra.mxu0 0
    %715 = vmatpush.bf16.msra.mxu0 0
    %716 = vmatpush.bf16.msra.mxu0 0
    %717 = vmatpush.bf16.msra.mxu0 0
    %718 = vmatpush.bf16.msra.mxu0 0
    %719 = vmatpush.bf16.msra.mxu0 0
    %720 = vmatpush.bf16.msra.mxu0 %v711
    %721 = vmatmul.bf16.gmra.mxu0 %v708
    %v722 = vpop.f32.mrf.mxu0
    %v723 = vadd.f32 0.0, %v722
    %v724 = vpop.f32.mrf.mxu0
    %725 = vdwg.mxu0
    %v727 = vsel %vm438, %v681, 0
    %v730 = vsel %vm690, %v685, 0
    %732 = vmatpush.bf16.msra.mxu0 0
    %733 = vmatpush.bf16.msra.mxu0 0
    %734 = vmatpush.bf16.msra.mxu0 0
    %735 = vmatpush.bf16.msra.mxu0 0
    %736 = vmatpush.bf16.msra.mxu0 0
    %737 = vmatpush.bf16.msra.mxu0 0
    %738 = vmatpush.bf16.msra.mxu0 0
    %739 = vmatpush.bf16.msra.mxu0 %v730
    %740 = vmatmul.bf16.gmra.mxu0 %v727
    %v741 = vpop.f32.mrf.mxu0
    %v742 = vadd.f32 0.0, %v741
    %v743 = vpop.f32.mrf.mxu0
    %744 = vdwg.mxu0
    %v746 = vsel %vm438, %v682, 0
    %v749 = vsel %vm690, %v686, 0
    %751 = vmatpush.bf16.msra.mxu0 0
    %752 = vmatpush.bf16.msra.mxu0 0
    %753 = vmatpush.bf16.msra.mxu0 0
    %754 = vmatpush.bf16.msra.mxu0 0
    %755 = vmatpush.bf16.msra.mxu0 0
    %756 = vmatpush.bf16.msra.mxu0 0
    %757 = vmatpush.bf16.msra.mxu0 0
    %758 = vmatpush.bf16.msra.mxu0 %v749
    %759 = vmatmul.bf16.gmra.mxu0 %v746
    %v760 = vpop.f32.mrf.mxu0
    %v761 = vadd.f32 0.0, %v760
    %v762 = vpop.f32.mrf.mxu0
    %763 = vdwg.mxu0
    %v764 = vsel %vm119, %v704, 0.0
    %v765 = vsel %vm119, %v723, 0.0
    %v766 = vadd.f32 %v764, %v765
    %v767 = vsel %vm119, %v742, 0.0
    %v768 = vadd.f32 %v766, %v767
    %v769 = vsel %vm119, %v761, 0.0
    %v770 = vadd.f32 %v768, %v769
    %v771 = vperm.slane %v94, 0
    %v772 = vadd.f32 %v770, %v771
    %v773 = vadd.f32 %v30, %v772
    %v774 = vsel %vm119, %v773, 0.0
    %775 = vadd.xlane.f32.xlu0 %v774
    %v776 = vpop.xlane.xlu0 %775
    %v777 = vmul.f32 %v776, 0.03125
    %v778 = vmul.f32 %v773, %v773
    %v779 = vsel %vm119, %v778, 0.0
    %780 = vadd.xlane.f32.xlu0 %v779
    %v781 = vpop.xlane.xlu0 %780
    %v782 = vmul.f32 %v781, 0.03125
    %v783 = vsub.f32 %v773, %v777
    %v784 = vmul.f32 %v777, %v777
    %v785 = vsub.f32 %v782, %v784
    %v786 = vadd.f32 %v785, 1e-05
    %v787 = vrsqrt.pop %v786
    %v788 = vmul.f32 %v787, %v786
    %v789 = vmul.f32 %v788, %v787
    %v790 = vmul.f32 0.5, %v789
    %v791 = vsub.f32 1.5, %v790
    %v792 = vmul.f32 %v787, %v791
    %vm793 = vweird.f32 %v786
    %vm794 = vweird.f32 %v787
    %vm795 = vmor %vm793, %vm794
    %v796 = vsel %vm795, %v787, %v792
    %v797 = vmul.f32 %v783, %v796
    %v798 = vperm.slane %v94, 1
    %v799 = vmul.f32 %v797, %v798
    %v800 = vperm.slane %v94, 2
    %v801 = vadd.f32 %v799, %v800
    %v802 = vpack.c.bf16 %v801, %v801
    %v803 = vld [vmem:[%s4] sm:$0xf]
    %v804 = vld [vmem:[%s4 + $0x4] sm:$0xf]
    %v805 = vld [vmem:[%s4 + $0x8] sm:$0xf]
    %v806 = vld [vmem:[%s4 + $0xc] sm:$0xf]
    %v807 = vperm.slane %v94, 3
    %v812 = vunpack.c.l.b16 %v803
    %v813 = vunpack.c.l.b16 %v804
    %v814 = vunpack.c.l.b16 %v805
    %v815 = vunpack.c.l.b16 %v806
    %v816 = vpack.c.b16 %v813, %v812
    %v817 = vpack.c.b16 %v815, %v814
    %v821 = vsel %vm119, %v802, 0
    %823 = vmatpush.bf16.msra.mxu0 0
    %824 = vmatpush.bf16.msra.mxu0 0
    %825 = vmatpush.bf16.msra.mxu0 0
    %826 = vmatpush.bf16.msra.mxu0 0
    %827 = vmatpush.bf16.msra.mxu0 0
    %828 = vmatpush.bf16.msra.mxu0 0
    %829 = vmatpush.bf16.msra.mxu0 %v817
    %830 = vmatpush.bf16.msra.mxu0 %v816
    %831 = vmatmul.bf16.gmra.mxu0 %v821
    %v832 = vpop.f32.mrf.mxu0
    %v833 = vadd.f32 %v807, %v832
    %v834 = vpop.f32.mrf.mxu0
    %835 = vdwg.mxu0
    %v836 = vmax.f32 %v833, 0.0
    %v837 = vpack.c.bf16 %v836, %v836
    %v838 = vld [vmem:[%s5] sm:$0xf]
    %v839 = vld [vmem:[%s5 + $0x4] sm:$0xf]
    %v840 = vld [vmem:[%s5 + $0x8] sm:$0xf]
    %v841 = vld [vmem:[%s5 + $0xc] sm:$0xf]
    %v842 = vperm.slane %v94, 4
    %v847 = vunpack.c.l.b16 %v838
    %v848 = vunpack.c.l.b16 %v839
    %v849 = vunpack.c.l.b16 %v840
    %v850 = vunpack.c.l.b16 %v841
    %v851 = vpack.c.b16 %v848, %v847
    %v852 = vpack.c.b16 %v850, %v849
    %v856 = vsel %vm119, %v837, 0
    %858 = vmatpush.bf16.msra.mxu0 0
    %859 = vmatpush.bf16.msra.mxu0 0
    %860 = vmatpush.bf16.msra.mxu0 0
    %861 = vmatpush.bf16.msra.mxu0 0
    %862 = vmatpush.bf16.msra.mxu0 0
    %863 = vmatpush.bf16.msra.mxu0 0
    %864 = vmatpush.bf16.msra.mxu0 %v852
    %865 = vmatpush.bf16.msra.mxu0 %v851
    %866 = vmatmul.bf16.gmra.mxu0 %v856
    %v867 = vpop.f32.mrf.mxu0
    %v868 = vadd.f32 %v842, %v867
    %v869 = vpop.f32.mrf.mxu0
    %870 = vdwg.mxu0
    %v871 = vadd.f32 %v801, %v868
    %v872 = vsel %vm119, %v871, 0.0
    %873 = vadd.xlane.f32.xlu0 %v872
    %v874 = vpop.xlane.xlu0 %873
    %v875 = vmul.f32 %v874, 0.03125
    %v876 = vmul.f32 %v871, %v871
    %v877 = vsel %vm119, %v876, 0.0
    %878 = vadd.xlane.f32.xlu0 %v877
    %v879 = vpop.xlane.xlu0 %878
    %v880 = vmul.f32 %v879, 0.03125
    %v881 = vsub.f32 %v871, %v875
    %v882 = vmul.f32 %v875, %v875
    %v883 = vsub.f32 %v880, %v882
    %v884 = vadd.f32 %v883, 1e-05
    %v885 = vrsqrt.pop %v884
    %v886 = vmul.f32 %v885, %v884
    %v887 = vmul.f32 %v886, %v885
    %v888 = vmul.f32 0.5, %v887
    %v889 = vsub.f32 1.5, %v888
    %v890 = vmul.f32 %v885, %v889
    %vm891 = vweird.f32 %v884
    %vm892 = vweird.f32 %v885
    %vm893 = vmor %vm891, %vm892
    %v894 = vsel %vm893, %v885, %v890
    %v895 = vmul.f32 %v881, %v894
    %v896 = vperm.slane %v94, 5
    %v897 = vmul.f32 %v895, %v896
    %v898 = vperm.slane %v94, 6
    %v899 = vadd.f32 %v897, %v898
    %900 = vst.msk [vmem:[#allocation2] sm:$0xff] %vm119, %v899
    // Predicated region
    $region30: #{tpu_custom_call.1} parent=1 // pred_check
      _
    $region31: #{tpu_custom_call.1} parent=1 // pred_check_branch
      %902 = sbr.rel (0) target = $region33
    $region32: #{tpu_custom_call.1} parent=1 // pred_region
      %904 = vsyncadd [#allocation3], 0
      %s906 = sshll.u32 [#allocation2], 4
      %s907 = int_to_ptr.vmem [resolvable:$true] %s906
      %s908 = sshll.u32 %s7, 4
      %s909 = int_to_ptr.hbm [resolvable:$true] %s908
      %911 = dma.vmem_to_hbm [thread:$0]  %s907, 128, %s909, [#allocation3]
    $region33: #{tpu_custom_call.1} parent=1 // pred_fallthru
      _
    // Predicated region
    $region34: #{tpu_custom_call.1} parent=1 // pred_check
      _
    $region35: #{tpu_custom_call.1} parent=1 // pred_check_branch
      %913 = sbr.rel (0) target = $region37
    $region36: #{tpu_custom_call.1} parent=1 // pred_region
      %915 = dma.done [#allocation3], 128
    $region37: #{tpu_custom_call.1} parent=1 // pred_fallthru
      _
    %916 = vsyncpa [#allocation3], 1

</llo_original>
